<compile_context>
chip_gen: v7x
topology: tpu7x:2x2x1
jax: 0.10.0
libtpu: 0.0.40
codegen_flags: <defaults>
</compile_context>

<pallas_src>
import functools
import math

import numpy as np

import jax
import jax.numpy as jnp
from jax.experimental import pallas as pl
from jax.experimental.pallas import tpu as pltpu

# torch: prob.clamp(min=0.0001, max=1.0).log()  ==  clip(log_prob, log(1e-4), 0)
_LOG_CLIP_MIN = math.log(0.0001)


def _cdiv(a, b):
    return -(-a // b)


def _round_up(a, b):
    return _cdiv(a, b) * b


def _ce_loss_kernel(x_ref, tgt_ref, out_ref, *, alpha_vals, mask_tail):
    x = x_ref[...].astype(jnp.float32)          # (C, R, 128)  rows dense on sublanes x lanes
    tgt = tgt_ref[...]                          # (R, 128)     int32 class ids (-1 = padding)
    C = x.shape[0]

    # Per-row logsumexp over the tiny leading class axis: pure full-vreg VPU work.
    m = jnp.max(x, axis=0)                      # (R, 128)
    s = jnp.sum(jnp.exp(x - m), axis=0)         # (R, 128)

    # Gather the target logit with a short static select chain (C compares on
    # row-shaped data) instead of an N*C one-hot multiply/reduce.
    x_t = jnp.where(tgt == 0, x[0], 0.0)
    for c in range(1, C):
        x_t = jnp.where(tgt == c, x[c], x_t)

    logp_t = (x_t - m) - jnp.log(s)             # log-softmax of the target logit
    logp_t = jnp.clip(logp_t, _LOG_CLIP_MIN, 0.0)   # == clamp(prob, 1e-4, 1).log()

    if alpha_vals is not None:
        a_t = jnp.full(tgt.shape, alpha_vals[0], jnp.float32)
        for c in range(1, C):
            a_t = jnp.where(tgt == c, jnp.float32(alpha_vals[c]), a_t)
        loss = -a_t * logp_t                    # (R, 128)
    else:
        loss = -logp_t

    if mask_tail:
        loss = jnp.where(tgt >= 0, loss, 0.0)   # padded rows contribute nothing

    # Per-lane partial sums; cross-lane / cross-block reduction happens in the
    # wrapper, so each grid step's epilogue is just a cheap sublane reduce.
    out_ref[...] = jnp.sum(loss, axis=0, keepdims=True)[None]


def ce_loss(pred, target, class_num, alpha=None, use_alpha=False,
            size_average=True, block_bytes=2 << 20):
    """Pallas implementation of CELoss.forward.

    pred:   any shape whose total size is a multiple of class_num
            (reshaped to (-1, class_num) like torch .view).
    target: integer class ids, total size == pred.size // class_num.
    """
    x2d = jnp.asarray(pred).reshape(-1, class_num)       # torch pred.view(-1, C)
    n = x2d.shape[0]
    t = jnp.asarray(target, jnp.int32).reshape(-1)
    assert t.shape[0] == n, "target size must match pred.size // class_num"

    itemsize = jnp.dtype(x2d.dtype).itemsize
    n_chunks = _cdiv(n, 128)                             # 128-row lane chunks

    # Block-size heuristic (logit bytes per grid step):
    #   * ~2 MiB default stays safely inside v5e's 16 MiB scoped VMEM once
    #     double-buffered together with the int32 targets; raise block_bytes
    #     to 4-8 MiB on v6e / v7x (32 MiB scoped default) if step overhead
    #     shows up in the profile.
    #   * second-minor block dim kept a multiple of 8 (f32/int32 sublane tile).
    #   * capped so large inputs always get >= ~4 grid steps, keeping the DMA
    #     pipeline (and both v7x TensorCores under "parallel") busy.
    chunk_bytes = class_num * 128 * itemsize
    budget_chunks = max(8, (block_bytes // chunk_bytes) // 8 * 8)
    cap_chunks = max(8, _round_up(_cdiv(n_chunks, 4), 8))
    chunks_per_block = min(budget_chunks, cap_chunks)
    n_blocks = _cdiv(n_chunks, chunks_per_block)
    n_chunks_pad = n_blocks * chunks_per_block
    n_pad = n_chunks_pad * 128

    mask_tail = n_pad != n
    if mask_tail:
        x2d = jnp.pad(x2d, ((0, n_pad - n), (0, 0)))
        t = jnp.pad(t, (0, n_pad - n), constant_values=-1)

    # Single fused relayout into the lane+sublane-dense (C, N/128, 128) form:
    # classes on the cheap leading axis, rows dense on sublanes x lanes.
    x3d = x2d.T.reshape(class_num, n_chunks_pad, 128)
    t2d = t.reshape(n_chunks_pad, 128)

    alpha_vals = None
    if use_alpha:
        # alpha is a construction-time constant in the torch module; bake it.
        # TODO(synk): a traced (non-static) alpha would need an SMEM input.
        alpha_vals = tuple(np.asarray(alpha, np.float32).reshape(-1).tolist())
        assert len(alpha_vals) == class_num

    kernel = functools.partial(_ce_loss_kernel, alpha_vals=alpha_vals,
                               mask_tail=mask_tail)

    partials = pl.pallas_call(
        kernel,
        out_shape=jax.ShapeDtypeStruct((n_blocks, 1, 128), jnp.float32),
        grid_spec=pltpu.PrefetchScalarGridSpec(
            num_scalar_prefetch=0,
            grid=(n_blocks,),
            in_specs=[
                pl.BlockSpec((class_num, chunks_per_block, 128),
                             lambda i: (0, i, 0)),
                pl.BlockSpec((chunks_per_block, 128), lambda i: (i, 0)),
            ],
            out_specs=pl.BlockSpec((1, 1, 128), lambda i: (i, 0, 0)),
        ),
        compiler_params=pltpu.CompilerParams(
            dimension_semantics=("parallel",)),          # shards blocks across TCs
    )(x3d, t2d)

    total = jnp.sum(partials)                            # tree-reduce lane partials
    if size_average:
        total = total / jnp.float32(n)
    return total


def _ce_loss_ref(pred, target, class_num, alpha=None, use_alpha=False,
                 size_average=True):
    """Pure-JAX reference mirroring the PyTorch module (in float32)."""
    x = jnp.asarray(pred, jnp.float32).reshape(-1, class_num)
    t = jnp.asarray(target, jnp.int32).reshape(-1)
    prob = jax.nn.softmax(x, axis=1)
    prob = jnp.clip(prob, 0.0001, 1.0)
    onehot = jax.nn.one_hot(t, class_num, dtype=jnp.float32)
    if use_alpha:
        w = jnp.asarray(alpha, jnp.float32).reshape(1, class_num)
        batch_loss = -w * jnp.log(prob) * onehot
    else:
        batch_loss = -jnp.log(prob) * onehot
    batch_loss = batch_loss.sum(axis=1)
    return batch_loss.mean() if size_average else batch_loss.sum()


if __name__ == "__main__":
    key = jax.random.PRNGKey(0)
    k1, k2, k3, k4 = jax.random.split(key, 4)

    class_num = 4
    # NCHW logits; view(-1, class_num) -> N = 2*4*16*16 / 4 = 512 rows
    pred = jax.random.normal(k1, (2, 4, 16, 16), dtype=jnp.float32)
    n_rows = pred.size // class_num
    target = jax.random.randint(k2, (n_rows,), 0, class_num, dtype=jnp.int32)
    alpha = [0.25, 0.5, 0.75, 1.0]

    # use_alpha=False path (default module config)
    loss = ce_loss(pred, target, class_num, use_alpha=False, size_average=True)
    loss = jax.block_until_ready(loss)
    ref = _ce_loss_ref(pred, target, class_num, use_alpha=False, size_average=True)
    assert jnp.allclose(loss, ref, rtol=1e-5, atol=1e-5), (loss, ref)

    # use_alpha=True path
    loss_a = ce_loss(pred, target, class_num, alpha=alpha, use_alpha=True,
                     size_average=True)
    loss_a = jax.block_until_ready(loss_a)
    ref_a = _ce_loss_ref(pred, target, class_num, alpha=alpha, use_alpha=True,
                         size_average=True)
    assert jnp.allclose(loss_a, ref_a, rtol=1e-5, atol=1e-5), (loss_a, ref_a)

    # size_average=False path
    loss_s = ce_loss(pred, target, class_num, use_alpha=False, size_average=False)
    loss_s = jax.block_until_ready(loss_s)
    ref_s = _ce_loss_ref(pred, target, class_num, use_alpha=False,
                         size_average=False)
    assert jnp.allclose(loss_s, ref_s, rtol=1e-5, atol=1e-4), (loss_s, ref_s)

    # ragged N (not a multiple of 128) exercises the masked tail path
    pred_r = jax.random.normal(k3, (3, 4, 10, 10), dtype=jnp.float32)   # N = 300
    n_r = pred_r.size // class_num
    target_r = jax.random.randint(k4, (n_r,), 0, class_num, dtype=jnp.int32)
    loss_r = ce_loss(pred_r, target_r, class_num, alpha=alpha, use_alpha=True,
                     size_average=True)
    loss_r = jax.block_until_ready(loss_r)
    ref_r = _ce_loss_ref(pred_r, target_r, class_num, alpha=alpha, use_alpha=True,
                         size_average=True)
    assert jnp.allclose(loss_r, ref_r, rtol=1e-5, atol=1e-5), (loss_r, ref_r)

    print("KERNEL_OK")
</pallas_src>

<mosaic_0001>
module attributes {stable_mosaic.version = 11 : i64} {
  func.func @_ce_loss_kernel(%arg0: i32, %arg1: memref<4x8x128xf32, #tpu.memory_space<vmem>>, %arg2: memref<8x128xi32, #tpu.memory_space<vmem>>, %arg3: memref<1x1x128xf32, #tpu.memory_space<vmem>>) attributes {dimension_semantics = [#tpu.dimension_semantics<parallel>], iteration_bounds = array<i64: 1>, scalar_prefetch = 0 : i64, scratch_operands = 0 : i64, tpu.core_type = #tpu.core_type<tc>, window_params = [{transform_indices = @transform_0, window_bounds = array<i64: 4, 8, 128>}, {transform_indices = @transform_1, window_bounds = array<i64: 8, 128>}, {transform_indices = @transform_2, window_bounds = array<i64: 1, 1, 128>}]} {
    %c0 = arith.constant 0 : index
    %c0_0 = arith.constant 0 : index
    %c0_1 = arith.constant 0 : index
    %0 = vector.load %arg1[%c0, %c0_0, %c0_1] : memref<4x8x128xf32, #tpu.memory_space<vmem>>, vector<4x8x128xf32>
    %c0_2 = arith.constant 0 : index
    %c0_3 = arith.constant 0 : index
    %1 = vector.load %arg2[%c0_2, %c0_3] : memref<8x128xi32, #tpu.memory_space<vmem>>, vector<8x128xi32>
    %cst = arith.constant dense<0xFF800000> : vector<8x128xf32>
    %2 = vector.multi_reduction <maximumf>, %0, %cst [0] : vector<4x8x128xf32> to vector<8x128xf32>
    %3 = vector.shape_cast %2 : vector<8x128xf32> to vector<1x8x128xf32>
    %4 = vector.broadcast %3 : vector<1x8x128xf32> to vector<4x8x128xf32>
    %5 = arith.subf %0, %4 : vector<4x8x128xf32>
    %6 = math.exp %5 : vector<4x8x128xf32>
    %cst_4 = arith.constant dense<0.000000e+00> : vector<8x128xf32>
    %7 = vector.multi_reduction <add>, %6, %cst_4 [0] : vector<4x8x128xf32> to vector<8x128xf32>
    %c0_i32 = arith.constant 0 : i32
    %8 = vector.broadcast %c0_i32 : i32 to vector<8x128xi32>
    %9 = arith.cmpi eq, %1, %8 : vector<8x128xi32>
    %10 = vector.extract_strided_slice %0 {offsets = [0, 0, 0], sizes = [1, 8, 128], strides = [1, 1, 1]} : vector<4x8x128xf32> to vector<1x8x128xf32>
    %11 = vector.shape_cast %10 : vector<1x8x128xf32> to vector<8x128xf32>
    %cst_5 = arith.constant 0.000000e+00 : f32
    %12 = vector.broadcast %cst_5 : f32 to vector<8x128xf32>
    %13 = arith.select %9, %11, %12 : vector<8x128xi1>, vector<8x128xf32>
    %c1_i32 = arith.constant 1 : i32
    %14 = vector.broadcast %c1_i32 : i32 to vector<8x128xi32>
    %15 = arith.cmpi eq, %1, %14 : vector<8x128xi32>
    %16 = vector.extract_strided_slice %0 {offsets = [1, 0, 0], sizes = [1, 8, 128], strides = [1, 1, 1]} : vector<4x8x128xf32> to vector<1x8x128xf32>
    %17 = vector.shape_cast %16 : vector<1x8x128xf32> to vector<8x128xf32>
    %18 = arith.select %15, %17, %13 : vector<8x128xi1>, vector<8x128xf32>
    %c2_i32 = arith.constant 2 : i32
    %19 = vector.broadcast %c2_i32 : i32 to vector<8x128xi32>
    %20 = arith.cmpi eq, %1, %19 : vector<8x128xi32>
    %21 = vector.extract_strided_slice %0 {offsets = [2, 0, 0], sizes = [1, 8, 128], strides = [1, 1, 1]} : vector<4x8x128xf32> to vector<1x8x128xf32>
    %22 = vector.shape_cast %21 : vector<1x8x128xf32> to vector<8x128xf32>
    %23 = arith.select %20, %22, %18 : vector<8x128xi1>, vector<8x128xf32>
    %c3_i32 = arith.constant 3 : i32
    %24 = vector.broadcast %c3_i32 : i32 to vector<8x128xi32>
    %25 = arith.cmpi eq, %1, %24 : vector<8x128xi32>
    %26 = vector.extract_strided_slice %0 {offsets = [3, 0, 0], sizes = [1, 8, 128], strides = [1, 1, 1]} : vector<4x8x128xf32> to vector<1x8x128xf32>
    %27 = vector.shape_cast %26 : vector<1x8x128xf32> to vector<8x128xf32>
    %28 = arith.select %25, %27, %23 : vector<8x128xi1>, vector<8x128xf32>
    %29 = arith.subf %28, %2 : vector<8x128xf32>
    %30 = math.log %7 : vector<8x128xf32>
    %31 = arith.subf %29, %30 : vector<8x128xf32>
    %cst_6 = arith.constant -9.21034049 : f32
    %cst_7 = arith.constant 0.000000e+00 : f32
    %32 = vector.broadcast %cst_6 : f32 to vector<8x128xf32>
    %33 = arith.maximumf %32, %31 : vector<8x128xf32>
    %34 = vector.broadcast %cst_7 : f32 to vector<8x128xf32>
    %35 = arith.minimumf %34, %33 : vector<8x128xf32>
    %cst_8 = arith.constant 0.000000e+00 : f32
    %36 = vector.broadcast %cst_8 : f32 to vector<8x128xf32>
    %37 = arith.subf %36, %35 : vector<8x128xf32>
    %c0_i32_9 = arith.constant 0 : i32
    %38 = vector.broadcast %c0_i32_9 : i32 to vector<8x128xi32>
    %39 = arith.cmpi sge, %1, %38 : vector<8x128xi32>
    %cst_10 = arith.constant 0.000000e+00 : f32
    %40 = vector.broadcast %cst_10 : f32 to vector<8x128xf32>
    %41 = arith.select %39, %37, %40 : vector<8x128xi1>, vector<8x128xf32>
    %cst_11 = arith.constant dense<0.000000e+00> : vector<128xf32>
    %42 = vector.multi_reduction <add>, %41, %cst_11 [0] : vector<8x128xf32> to vector<128xf32>
    %43 = vector.shape_cast %42 : vector<128xf32> to vector<1x128xf32>
    %44 = vector.shape_cast %43 : vector<1x128xf32> to vector<1x1x128xf32>
    %c0_12 = arith.constant 0 : index
    %c0_13 = arith.constant 0 : index
    %c0_14 = arith.constant 0 : index
    %45 = vector.load %arg3[%c0_12, %c0_13, %c0_14] : memref<1x1x128xf32, #tpu.memory_space<vmem>>, vector<1x1x128xf32>
    tpu.vector_store %arg3[%c0_12, %c0_13, %c0_14], %44 {strides = array<i32>} : memref<1x1x128xf32, #tpu.memory_space<vmem>>, vector<1x1x128xf32>,
    return
  }
  func.func @transform_0(%arg0: i32) -> (i32, i32, i32) {
    %c0_i32 = arith.constant 0 : i32
    %c0_i32_0 = arith.constant 0 : i32
    %c0_i32_1 = arith.constant 0 : i32
    return %c0_i32, %arg0, %c0_i32_0 : i32, i32, i32
  }
  func.func @transform_1(%arg0: i32) -> (i32, i32) {
    %c0_i32 = arith.constant 0 : i32
    %c0_i32_0 = arith.constant 0 : i32
    return %arg0, %c0_i32 : i32, i32
  }
  func.func @transform_2(%arg0: i32) -> (i32, i32, i32) {
    %c0_i32 = arith.constant 0 : i32
    %c0_i32_0 = arith.constant 0 : i32
    %c0_i32_1 = arith.constant 0 : i32
    return %arg0, %c0_i32, %c0_i32_0 : i32, i32, i32
  }
}

</mosaic_0001>

<llo_original>
// kernel: tpu_custom_call.1
$region0: #{tpu_custom_call.1}
  #allocation0 [shape = 'u32[]', space=smem, size = 0x4, offset = 0x4, fixed_abs, tag = 'smem constant byte address 0x4 - core index']
  #allocation1 [shape = 'u32[144,128]{1,0:T(1,128)}', space=vmem, size = 0x12000, scoped, tag = 'internal scratch']
  %s0 = inlined_call_operand.hbm [shape: f32[4,8,128], index: 0, kind: input, shape index: {}]
  %s1 = inlined_call_operand.hbm [shape: s32[8,128], index: 1, kind: input, shape index: {}]
  %s2 = inlined_call_operand.hbm [shape: f32[1,1,128], index: 2, kind: output, shape index: {}]
  %s3 = sld [smem:[#allocation0]]
  $region26: #{tpu_custom_call.1} parent=0
    _
  %s5 = ssub.s32 1, %s3
  %s6 = scalar_select 0, %s5, %s3
  $region1: #{tpu_custom_call.1} parent=0
    #allocation2 [shape = 'u8[16384]{0}', space=vmem, size = 0x4000, scoped, tag = 'input window, operand 0, single buffered']
    #allocation3 [shape = 's32[1]{0}', space=sflag, size = 0x4, scoped, tag = 'scoped memory for tpu_custom_call.1']
    #allocation4 [shape = 's32[1]{0}', space=sflag, size = 0x4, scoped, tag = 'scoped memory for tpu_custom_call.1']
    #allocation5 [shape = 'u8[4096]{0}', space=vmem, size = 0x1000, scoped, tag = 'input window, operand 1, single buffered']
    #allocation6 [shape = 's32[1]{0}', space=sflag, size = 0x4, scoped, tag = 'scoped memory for tpu_custom_call.1']
    #allocation7 [shape = 'u8[512]{0}', space=vmem, size = 0x400, scoped, tag = 'output window, operand 0, single buffered']
    %7 = vsyncpa [#allocation3], 0
    %8 = vsyncpa [#allocation6], 0
    %9 = vsyncpa [#allocation4], 0
    // Predicated region
    $region2: #{tpu_custom_call.1} parent=1 // pred_check
      _
    $region3: #{tpu_custom_call.1} parent=1 // pred_check_branch
      %11 = sbr.rel (0) target = $region5
    $region4: #{tpu_custom_call.1} parent=1 // pred_region
      %s13 = ssub.s32 512, 512
      %14 = vsyncadd [#allocation3], %s13
      %s15 = sshll.u32 [#allocation2], 4
      %s16 = int_to_ptr.vmem [resolvable:$true] %s15
      %21 = dma.hbm_to_vmem [thread:$0]  %s0, 512, %s16, [#allocation3], 128, 128, 8
    $region5: #{tpu_custom_call.1} parent=1 // pred_fallthru
      _
    // Predicated region
    $region6: #{tpu_custom_call.1} parent=1 // pred_check
      _
    $region7: #{tpu_custom_call.1} parent=1 // pred_check_branch
      %23 = sbr.rel (0) target = $region9
    $region8: #{tpu_custom_call.1} parent=1 // pred_region
      %s25 = ssub.s32 128, 128
      %26 = vsyncadd [#allocation6], %s25
      %s28 = sshll.u32 [#allocation5], 4
      %s29 = int_to_ptr.vmem [resolvable:$true] %s28
      %31 = dma.hbm_to_vmem [thread:$0]  %s1, 128, %s29, [#allocation6]
    $region9: #{tpu_custom_call.1} parent=1 // pred_fallthru
      _
    // Predicated region
    $region10: #{tpu_custom_call.1} parent=1 // pred_check
      _
    $region11: #{tpu_custom_call.1} parent=1 // pred_check_branch
      %33 = sbr.rel (0) target = $region13
    $region12: #{tpu_custom_call.1} parent=1 // pred_region
      %34 = dma.done [#allocation3], 512
    $region13: #{tpu_custom_call.1} parent=1 // pred_fallthru
      _
    // Predicated region
    $region14: #{tpu_custom_call.1} parent=1 // pred_check
      _
    $region15: #{tpu_custom_call.1} parent=1 // pred_check_branch
      %36 = sbr.rel (0) target = $region17
    $region16: #{tpu_custom_call.1} parent=1 // pred_region
      %37 = dma.done [#allocation6], 128
    $region17: #{tpu_custom_call.1} parent=1 // pred_fallthru
      _
    %v38 = vld [vmem:[#allocation2] sm:$0xff]
    %v39 = vld [vmem:[#allocation2 + $0x8] sm:$0xff]
    %v40 = vld [vmem:[#allocation2 + $0x10] sm:$0xff]
    %v41 = vld [vmem:[#allocation2 + $0x18] sm:$0xff]
    %v42 = vld [vmem:[#allocation5] sm:$0xff]
    %v43 = vmax.f32 %v38, %v39
    %v44 = vmax.f32 %v40, %v41
    %v45 = vmax.f32 %v43, %v44
    %v46 = vsub.f32 %v38, %v45
    %v47 = vsub.f32 %v39, %v45
    %v48 = vsub.f32 %v40, %v45
    %v49 = vsub.f32 %v41, %v45
    %v50 = vmul.f32 %v46, 1.442695
    %v51 = vpow.pop %v50
    %v52 = vmul.f32 %v47, 1.442695
    %v53 = vpow.pop %v52
    %v54 = vmul.f32 %v48, 1.442695
    %v55 = vpow.pop %v54
    %v56 = vmul.f32 %v49, 1.442695
    %v57 = vpow.pop %v56
    %v58 = vadd.f32 %v51, %v53
    %v59 = vadd.f32 %v58, %v55
    %v60 = vadd.f32 %v59, %v57
    %vm61 = vcmp.eq.s32.totalorder %v42, 0
    %v62 = vsel %vm61, %v38, 0.0
    %vm63 = vcmp.eq.s32.totalorder %v42, 1
    %v64 = vsel %vm63, %v39, %v62
    %vm65 = vcmp.eq.s32.totalorder %v42, 2
    %v66 = vsel %vm65, %v40, %v64
    %vm67 = vcmp.eq.s32.totalorder %v42, 3
    %v68 = vsel %vm67, %v41, %v66
    %v69 = vsub.f32 %v68, %v45
    %v70 = vlog2.pop %v60
    %v71 = vmul.f32 %v70, 0.6931472
    %v72 = vsub.f32 %v69, %v71
    %v73 = vmax.f32 %v72, -9.2103405
    %v74 = vmin.f32 %v73, 0.0
    %v75 = vsub.f32 0.0, %v74
    %vm76 = vcmp.ge.s32.totalorder %v42, 0
    %v77 = vsel %vm76, %v75, 0.0
    %v78 = vrot.slane %v77, 4
    %v79 = vadd.f32 %v77, %v78
    %v80 = vrot.slane %v79, 2
    %v81 = vadd.f32 %v79, %v80
    %v82 = vrot.slane %v81, 1
    %v83 = vadd.f32 %v81, %v82
    %84 = vst [vmem:[#allocation7] sm:$0x1] %v83
    // Predicated region
    $region18: #{tpu_custom_call.1} parent=1 // pred_check
      _
    $region19: #{tpu_custom_call.1} parent=1 // pred_check_branch
      %86 = sbr.rel (0) target = $region21
    $region20: #{tpu_custom_call.1} parent=1 // pred_region
      %s88 = ssub.s32 16, 16
      %89 = vsyncadd [#allocation4], %s88
      %s91 = sshll.u32 [#allocation7], 4
      %s92 = int_to_ptr.vmem [resolvable:$true] %s91
      %94 = dma.vmem_to_hbm [thread:$0]  %s92, 16, %s2, [#allocation4]
    $region21: #{tpu_custom_call.1} parent=1 // pred_fallthru
      _
    // Predicated region
    $region22: #{tpu_custom_call.1} parent=1 // pred_check
      _
    $region23: #{tpu_custom_call.1} parent=1 // pred_check_branch
      %96 = sbr.rel (0) target = $region25
    $region24: #{tpu_custom_call.1} parent=1 // pred_region
      %97 = dma.done [#allocation4], 16
    $region25: #{tpu_custom_call.1} parent=1 // pred_fallthru
      _
    %98 = vsyncpa [#allocation3], 1
    %99 = vsyncpa [#allocation6], 1
    %100 = vsyncpa [#allocation4], 1

</llo_original>
